<compile_context>
chip_gen: v6e
topology: v6e:2x2x1
jax: 0.10.0
libtpu: 0.0.40
codegen_flags: <defaults>
</compile_context>

<pallas_src>
import numpy as np
import jax
import jax.numpy as jnp
from jax.experimental import pallas as pl

# ----- Static model configuration (minigrid-style obs_space['image'] = (7,7,3), 7 actions) -----
B = 2
H = W = 7
CIN = 3
C1, C2, C3 = 16, 32, 64
H1, W1 = H - 1, W - 1            # conv1 output grid: 6x6
H2, W2 = H1 // 2, W1 // 2        # maxpool output grid: 3x3
H3, W3 = H2 - 1, W2 - 1          # conv2 output grid: 2x2
H4, W4 = H3 - 1, W3 - 1          # conv3 output grid: 1x1
EMB = H4 * W4 * C3               # 64 == image_embedding_size
HID = 64                         # hidden_dim
ACT = 7                          # action_space.n

RS = H1 * W1                     # rows per sample in the flat post-conv1 row space (36)
# 2x2 conv tap row-offsets on the stride-2 pooled grid (row r = b*RS + W1*h + w),
# tap order (di,dj) = (0,0),(0,1),(1,0),(1,1) -> offsets (0, 2, 12, 14).
OFF2 = tuple(2 * W1 * di + 2 * dj for di in (0, 1) for dj in (0, 1))
OFF3 = OFF2

# Packed-parameter slab row offsets (all starts are multiples of 8 sublanes).
CW1, CW2, CW3 = 0, 16, 80              # conv weights: w1 (12 rows, padded block of 16), w2, w3
CW_ROWS = CW3 + 4 * C2                 # 208
FW1, FW2, FW3 = 0, HID, 2 * HID        # fc weights
FW_ROWS = 3 * HID                      # 192
NBIAS = 6                              # bias slab: one bias vector per row


def _slab_lengths(nb):
    """Static slab lengths + derivation that no tap ever reads a junk / out-of-range row."""
    L1 = nb * RS                          # conv1 output rows (one per output pixel, no junk)
    LP = L1 - 1 - W1                      # pooled slab rows after the two shifted maxes
    L2 = (nb - 1) * RS + OFF2[-1] + 1     # conv2 slab rows
    L3 = (nb - 1) * RS + 1                # conv3 slab rows
    # A 2x2 pooling window starting at an even (row, col) never crosses a sample boundary.
    assert 2 * W1 * (H2 - 1) + 2 * (W2 - 1) + W1 + 1 < RS
    # Every pooled row conv2 consumes (base b*RS + 2*W1*p + 2*q, plus tap offset) exists.
    assert (nb - 1) * RS + 2 * W1 * (H3 - 1) + 2 * (W3 - 1) + OFF2[-1] <= LP - 1
    # conv2 slab taps stay inside the pooled slab; conv3 taps stay inside the conv2 slab.
    assert OFF2[-1] + L2 - 1 <= LP - 1
    assert OFF3[-1] + L3 - 1 <= L2 - 1
    # The embedding row of every sample exists in the conv3 slab.
    assert (nb - 1) * RS <= L3 - 1
    return L1, LP, L2, L3


def _mm(a, b):
    # Default matmul precision (feedback #2): correctness is asserted against a
    # HIGHEST-precision pure-JAX reference in __main__ with a tolerance sized for
    # the worst-case single-pass-bf16 lowering of these f32 dots.
    return jnp.dot(a, b, preferred_element_type=jnp.float32)


def disc_kernel(x_ref,      # (B*RS, 4*CIN)  wrapper-side im2col of the observation
                a_ref,      # (B, 1) int32   actions
                wc_ref,     # (CW_ROWS, 64)  fused conv weights: (4*Cin, Cout) blocks
                wf_ref,     # (FW_ROWS, 64)  fc weights, (in, out) blocks
                b_ref,      # (NBIAS, 64)    biases, one vector per row
                logp_ref,   # (B, ACT)  out: log-softmax table (stands in for the Categorical)
                lp_ref):    # (B, 1)    out: dist.log_prob(action)
    rows = x_ref.shape[0]
    assert rows % RS == 0, "input rows must be a whole number of samples"
    nb = rows // RS
    L1, LP, L2, L3 = _slab_lengths(nb)

    # ---- Conv2d(3,16,2x2) + ReLU: taps pre-fused into K wrapper-side -> ONE dot.
    w1 = wc_ref[CW1:CW1 + 4 * CIN, 0:C1]
    y1 = jnp.maximum(_mm(x_ref[...], w1) + b_ref[0:1, 0:C1], 0.0)            # (L1, C1)

    # ---- MaxPool2d(2x2, stride 2): two full-slab maxes over row-shifted views.
    # pool[b*RS + 2*W1*i + 2*j] == pooled value at (b, i, j); other rows are junk
    # and (per the asserts above) never read downstream.
    wmax = jnp.maximum(y1[:L1 - 1], y1[1:L1])
    pool = jnp.maximum(wmax[:LP], wmax[W1:W1 + LP])                          # (LP, C1)

    # ---- Conv2d(16,32,2x2) on the stride-2 pooled grid: the 4 tap slabs are
    # lane-concatenated into one K=4*C1 operand -> ONE dot (was 4 K=16 dots + adds).
    w2 = wc_ref[CW2:CW2 + 4 * C1, 0:C2]
    lhs2 = jnp.concatenate([pool[o:o + L2] for o in OFF2], axis=1)           # (L2, 4*C1)
    y2 = jnp.maximum(_mm(lhs2, w2) + b_ref[1:2, 0:C2], 0.0)                  # (L2, C2)

    # ---- Conv2d(32,64,2x2): same fusion, K=4*C2=128 -> ONE dot.
    w3 = wc_ref[CW3:CW3 + 4 * C2, 0:C3]
    lhs3 = jnp.concatenate([y2[o:o + L3] for o in OFF3], axis=1)             # (L3, 4*C2)
    z3 = _mm(lhs3, w3)                                                       # (L3, C3)

    # ---- Per-sample embedding rows live at r = b*RS.  Pick them with one tiny
    # selection matmul (MXU has plenty of slack) instead of B single-row slices
    # + concat (O(B) sublane gathers), then apply conv3 bias + ReLU.
    col = jax.lax.broadcasted_iota(jnp.int32, (nb, L3), 1)
    row = jax.lax.broadcasted_iota(jnp.int32, (nb, L3), 0)
    sel = jnp.where(col == row * RS, 1.0, 0.0)                               # (nb, L3)
    emb = jnp.maximum(_mm(sel, z3) + b_ref[2:3, 0:C3], 0.0)                  # (nb, EMB)

    # ---- fc: Linear -> Tanh -> Linear -> Tanh -> Linear, batched over the samples.
    h1 = jnp.tanh(_mm(emb, wf_ref[FW1:FW1 + HID, :]) + b_ref[3:4, 0:HID])
    h2 = jnp.tanh(_mm(h1, wf_ref[FW2:FW2 + HID, :]) + b_ref[4:5, 0:HID])
    logits = _mm(h2, wf_ref[FW3:FW3 + HID, 0:ACT]) + b_ref[5:6, 0:ACT]       # (nb, ACT)

    # ---- F.log_softmax == Categorical(logits=...) normalized log-probs.
    m = jnp.max(logits, axis=1, keepdims=True)
    z = logits - m
    logp = z - jnp.log(jnp.sum(jnp.exp(z), axis=1, keepdims=True))
    logp_ref[...] = logp

    # ---- dist.log_prob(action): in-kernel one-hot gather (second output).
    lane = jax.lax.broadcasted_iota(jnp.int32, (nb, ACT), 1)
    onehot = jnp.where(lane == a_ref[...], 1.0, 0.0)
    lp_ref[...] = jnp.sum(logp * onehot, axis=1, keepdims=True)


def init_disc_params(key):
    """Natural-layout parameters (HWIO convs, (in,out) linears), Torch-equivalent init."""
    ks = jax.random.split(key, 9)

    # TODO(synk): Conv2d's exact PyTorch kaiming-uniform default init is replaced by a
    # deterministic scaled normal (weights/biases); the Linear layers follow the
    # module's init_params() exactly (row-normalized N(0,1) weights, zero bias).
    def conv_w(k, cin, cout):
        return jax.random.normal(k, (2, 2, cin, cout), jnp.float32) / np.sqrt(4 * cin)

    def conv_b(k, cin, cout):
        return jax.random.normal(k, (cout,), jnp.float32) / np.sqrt(4 * cin)

    def linear_w(k, fan_in, fan_out):
        w = jax.random.normal(k, (fan_out, fan_in), jnp.float32)
        w = w / jnp.sqrt(jnp.sum(w * w, axis=1, keepdims=True))
        return w.T                      # stored (in, out) so `x @ W` == torch `x @ weight.T`

    return dict(
        w1=conv_w(ks[0], CIN, C1), b1=conv_b(ks[1], CIN, C1),
        w2=conv_w(ks[2], C1, C2), b2=conv_b(ks[3], C1, C2),
        w3=conv_w(ks[4], C2, C3), b3=conv_b(ks[5], C2, C3),
        wf1=linear_w(ks[6], EMB, HID), bf1=jnp.zeros((HID,), jnp.float32),
        wf2=linear_w(ks[7], HID, HID), bf2=jnp.zeros((HID,), jnp.float32),
        wf3=linear_w(ks[8], HID, ACT), bf3=jnp.zeros((ACT,), jnp.float32),
    )


def pack_params(p):
    """One-time (init-time) repack into kernel layout: 3 VMEM slabs instead of 13 operands,
    conv taps pre-fused into the K dim, every in-kernel slice start 8-sublane aligned."""
    wc = jnp.zeros((CW_ROWS, 64), jnp.float32)
    wc = wc.at[CW1:CW1 + 4 * CIN, 0:C1].set(p['w1'].reshape(4 * CIN, C1))
    wc = wc.at[CW2:CW2 + 4 * C1, 0:C2].set(p['w2'].reshape(4 * C1, C2))
    wc = wc.at[CW3:CW3 + 4 * C2, 0:C3].set(p['w3'].reshape(4 * C2, C3))

    wf = jnp.zeros((FW_ROWS, 64), jnp.float32)
    wf = wf.at[FW1:FW1 + HID, :].set(p['wf1'])
    wf = wf.at[FW2:FW2 + HID, :].set(p['wf2'])
    wf = wf.at[FW3:FW3 + HID, 0:ACT].set(p['wf3'])

    bias = jnp.zeros((NBIAS, 64), jnp.float32)
    for i, (name, width) in enumerate((('b1', C1), ('b2', C2), ('b3', C3),
                                       ('bf1', HID), ('bf2', HID), ('bf3', ACT))):
        bias = bias.at[i, 0:width].set(p[name])

    return dict(wconv=wc, wfc=wf, bias=bias)


@jax.jit
def disc_model_forward(obs, action, memory, packed):
    """obs: (B, 7, 7, 3) NHWC float32; action: (B, 1) int; memory is passed through."""
    batch = obs.shape[0]
    assert obs.shape[1:] == (H, W, CIN), f"unexpected obs shape {obs.shape}"

    # Layout plumbing only: im2col the 2x2/stride-1 conv1 taps into the channel dim so the
    # kernel's first conv is a single (B*36, 12) @ (12, 16) dot.  Tap order
    # (di,dj) = (0,0),(0,1),(1,0),(1,1) matches the (4*CIN, C1) weight packing.
    cols = jnp.concatenate(
        [obs[:, 0:H1, 0:W1, :], obs[:, 0:H1, 1:W, :],
         obs[:, 1:H, 0:W1, :], obs[:, 1:H, 1:W, :]], axis=-1)
    x_cols = cols.reshape(batch * RS, 4 * CIN)

    # Single gridless pallas_call: 5 operands, everything resident in VMEM (~120 KB),
    # no per-sample grid, both outputs produced in one launch.
    # TODO(synk): if batch grows to O(100+) on v7x, add a batch-block grid with
    # dimension_semantics=("parallel",) to use its second TensorCore; at B=2 a grid only
    # adds per-step overhead on single-TC v5e/v6e, so it stays gridless.
    logp, log_prob = pl.pallas_call(
        disc_kernel,
        out_shape=(jax.ShapeDtypeStruct((batch, ACT), jnp.float32),
                   jax.ShapeDtypeStruct((batch, 1), jnp.float32)),
    )(x_cols, action.astype(jnp.int32), packed['wconv'], packed['wfc'], packed['bias'])

    # The Categorical "dist" is returned as its normalized log-prob table; memory is
    # returned unchanged (use_memory=False).
    return logp, log_prob, memory


def reference_forward(obs, action, memory, params):
    """Pure-JAX reference of the PyTorch forward pass at HIGHEST matmul precision."""
    p = params
    prec = jax.lax.Precision.HIGHEST

    def conv(x, w, b):
        y = jax.lax.conv_general_dilated(
            x, w, window_strides=(1, 1), padding='VALID',
            dimension_numbers=('NHWC', 'HWIO', 'NHWC'), precision=prec)
        return y + b.reshape(1, 1, 1, -1)

    x = jax.nn.relu(conv(obs, p['w1'], p['b1']))
    x = jax.lax.reduce_window(x, -jnp.inf, jax.lax.max,
                              (1, 2, 2, 1), (1, 2, 2, 1), 'VALID')
    x = jax.nn.relu(conv(x, p['w2'], p['b2']))
    x = jax.nn.relu(conv(x, p['w3'], p['b3']))
    emb = x.reshape(x.shape[0], -1)
    h = jnp.tanh(jnp.dot(emb, p['wf1'], precision=prec) + p['bf1'])
    h = jnp.tanh(jnp.dot(h, p['wf2'], precision=prec) + p['bf2'])
    logits = jnp.dot(h, p['wf3'], precision=prec) + p['bf3']
    logp = jax.nn.log_softmax(logits, axis=1)
    lpa = jnp.take_along_axis(logp, action, axis=1)
    return logp, lpa, memory


if __name__ == "__main__":
    key = jax.random.PRNGKey(0)
    k_obs, k_act, k_par = jax.random.split(key, 3)

    obs = jax.random.normal(k_obs, (B, H, W, CIN), jnp.float32)          # NHWC
    action = jax.random.randint(k_act, (B, 1), 0, ACT, dtype=jnp.int32)
    memory = jnp.zeros((B, 2 * EMB), jnp.float32)                        # memory_size = 2*semi_memory_size
    params = init_disc_params(k_par)
    packed = pack_params(params)                                         # once, at init time

    logp, log_prob, mem_out = disc_model_forward(obs, action, memory, packed)
    jax.block_until_ready((logp, log_prob, mem_out))

    # Re-validated tolerance (feedback #2): the reference stays at HIGHEST matmul
    # precision while the kernel runs default precision; 5e-2 covers the worst case
    # (single-pass bf16 MXU lowering of the in-kernel f32 dots) without degrading
    # the reference the same way.
    ref_logp, ref_lpa, _ = reference_forward(obs, action, memory, params)
    np.testing.assert_allclose(np.asarray(logp), np.asarray(ref_logp), rtol=0, atol=5e-2)
    np.testing.assert_allclose(np.asarray(log_prob), np.asarray(ref_lpa), rtol=0, atol=5e-2)
    # Exact self-consistency of the in-kernel one-hot gather against the emitted table.
    np.testing.assert_allclose(
        np.asarray(log_prob),
        np.take_along_axis(np.asarray(logp), np.asarray(action), axis=1),
        rtol=0, atol=1e-6)

    print("KERNEL_OK")
</pallas_src>

<mosaic_0001>
module attributes {stable_mosaic.version = 11 : i64} {
  func.func @disc_kernel(%arg0: memref<72x12xf32, #tpu.memory_space<vmem>>, %arg1: memref<2x1xi32, #tpu.memory_space<vmem>>, %arg2: memref<208x64xf32, #tpu.memory_space<vmem>>, %arg3: memref<192x64xf32, #tpu.memory_space<vmem>>, %arg4: memref<6x64xf32, #tpu.memory_space<vmem>>, %arg5: memref<2x7xf32, #tpu.memory_space<vmem>>, %arg6: memref<2x1xf32, #tpu.memory_space<vmem>>) attributes {dimension_semantics = [], scalar_prefetch = 0 : i64, scratch_operands = 0 : i64, tpu.core_type = #tpu.core_type<tc>} {
    %c0 = arith.constant 0 : index
    %c0_0 = arith.constant 0 : index
    %0 = vector.load %arg2[%c0, %c0_0] : memref<208x64xf32, #tpu.memory_space<vmem>>, vector<12x16xf32>
    %c0_1 = arith.constant 0 : index
    %c0_2 = arith.constant 0 : index
    %1 = vector.load %arg0[%c0_1, %c0_2] : memref<72x12xf32, #tpu.memory_space<vmem>>, vector<72x12xf32>
    %cst = arith.constant dense<0.000000e+00> : vector<72x16xf32>
    %2 = tpu.matmul %1, %0, %cst {dimension_numbers = #tpu.dot_dimension_numbers<[1], [0], [0], [1], [0, 0, 1, 1], [], []>} : vector<72x12xf32>, vector<12x16xf32>, vector<72x16xf32> -> vector<72x16xf32>
    %c0_3 = arith.constant 0 : index
    %c0_4 = arith.constant 0 : index
    %3 = vector.load %arg4[%c0_3, %c0_4] : memref<6x64xf32, #tpu.memory_space<vmem>>, vector<1x16xf32>
    %4 = vector.broadcast %3 : vector<1x16xf32> to vector<72x16xf32>
    %5 = arith.addf %2, %4 : vector<72x16xf32>
    %cst_5 = arith.constant 0.000000e+00 : f32
    %6 = vector.broadcast %cst_5 : f32 to vector<72x16xf32>
    %7 = arith.maximumf %5, %6 : vector<72x16xf32>
    %8 = vector.extract_strided_slice %7 {offsets = [0, 0], sizes = [71, 16], strides = [1, 1]} : vector<72x16xf32> to vector<71x16xf32>
    %9 = vector.extract_strided_slice %7 {offsets = [1, 0], sizes = [71, 16], strides = [1, 1]} : vector<72x16xf32> to vector<71x16xf32>
    %10 = arith.maximumf %8, %9 : vector<71x16xf32>
    %11 = vector.extract_strided_slice %10 {offsets = [0, 0], sizes = [65, 16], strides = [1, 1]} : vector<71x16xf32> to vector<65x16xf32>
    %12 = vector.extract_strided_slice %10 {offsets = [6, 0], sizes = [65, 16], strides = [1, 1]} : vector<71x16xf32> to vector<65x16xf32>
    %13 = arith.maximumf %11, %12 : vector<65x16xf32>
    %c16 = arith.constant 16 : index
    %c0_6 = arith.constant 0 : index
    %14 = vector.load %arg2[%c16, %c0_6] : memref<208x64xf32, #tpu.memory_space<vmem>>, vector<64x32xf32>
    %15 = vector.extract_strided_slice %13 {offsets = [0, 0], sizes = [51, 16], strides = [1, 1]} : vector<65x16xf32> to vector<51x16xf32>
    %16 = vector.extract_strided_slice %13 {offsets = [2, 0], sizes = [51, 16], strides = [1, 1]} : vector<65x16xf32> to vector<51x16xf32>
    %17 = vector.extract_strided_slice %13 {offsets = [12, 0], sizes = [51, 16], strides = [1, 1]} : vector<65x16xf32> to vector<51x16xf32>
    %18 = vector.extract_strided_slice %13 {offsets = [14, 0], sizes = [51, 16], strides = [1, 1]} : vector<65x16xf32> to vector<51x16xf32>
    %19 = tpu.concatenate %15, %16, %17, %18 in 1 : vector<51x16xf32>, vector<51x16xf32>, vector<51x16xf32>, vector<51x16xf32> -> vector<51x64xf32>
    %cst_7 = arith.constant dense<0.000000e+00> : vector<51x32xf32>
    %20 = tpu.matmul %19, %14, %cst_7 {dimension_numbers = #tpu.dot_dimension_numbers<[1], [0], [0], [1], [0, 0, 1, 1], [], []>} : vector<51x64xf32>, vector<64x32xf32>, vector<51x32xf32> -> vector<51x32xf32>
    %c1 = arith.constant 1 : index
    %c0_8 = arith.constant 0 : index
    %21 = vector.load %arg4[%c1, %c0_8] : memref<6x64xf32, #tpu.memory_space<vmem>>, vector<1x32xf32>
    %22 = vector.broadcast %21 : vector<1x32xf32> to vector<51x32xf32>
    %23 = arith.addf %20, %22 : vector<51x32xf32>
    %cst_9 = arith.constant 0.000000e+00 : f32
    %24 = vector.broadcast %cst_9 : f32 to vector<51x32xf32>
    %25 = arith.maximumf %23, %24 : vector<51x32xf32>
    %c80 = arith.constant 80 : index
    %c0_10 = arith.constant 0 : index
    %26 = vector.load %arg2[%c80, %c0_10] : memref<208x64xf32, #tpu.memory_space<vmem>>, vector<128x64xf32>
    %27 = vector.extract_strided_slice %25 {offsets = [0, 0], sizes = [37, 32], strides = [1, 1]} : vector<51x32xf32> to vector<37x32xf32>
    %28 = vector.extract_strided_slice %25 {offsets = [2, 0], sizes = [37, 32], strides = [1, 1]} : vector<51x32xf32> to vector<37x32xf32>
    %29 = vector.extract_strided_slice %25 {offsets = [12, 0], sizes = [37, 32], strides = [1, 1]} : vector<51x32xf32> to vector<37x32xf32>
    %30 = vector.extract_strided_slice %25 {offsets = [14, 0], sizes = [37, 32], strides = [1, 1]} : vector<51x32xf32> to vector<37x32xf32>
    %31 = tpu.concatenate %27, %28, %29, %30 in 1 : vector<37x32xf32>, vector<37x32xf32>, vector<37x32xf32>, vector<37x32xf32> -> vector<37x128xf32>
    %cst_11 = arith.constant dense<0.000000e+00> : vector<37x64xf32>
    %32 = tpu.matmul %31, %26, %cst_11 {dimension_numbers = #tpu.dot_dimension_numbers<[1], [0], [0], [1], [0, 0, 1, 1], [], []>} : vector<37x128xf32>, vector<128x64xf32>, vector<37x64xf32> -> vector<37x64xf32>
    %33 = tpu.iota {dimensions = array<i32: 1>} : vector<2x37xi32>
    %34 = tpu.iota {dimensions = array<i32: 0>} : vector<2x37xi32>
    %c36_i32 = arith.constant 36 : i32
    %35 = vector.broadcast %c36_i32 : i32 to vector<2x37xi32>
    %36 = arith.muli %34, %35 : vector<2x37xi32>
    %37 = arith.cmpi eq, %33, %36 : vector<2x37xi32>
    %cst_12 = arith.constant 1.000000e+00 : f32
    %cst_13 = arith.constant 0.000000e+00 : f32
    %38 = vector.broadcast %cst_12 : f32 to vector<2x37xf32>
    %39 = vector.broadcast %cst_13 : f32 to vector<2x37xf32>
    %40 = arith.select %37, %38, %39 : vector<2x37xi1>, vector<2x37xf32>
    %cst_14 = arith.constant dense<0.000000e+00> : vector<2x64xf32>
    %41 = tpu.matmul %40, %32, %cst_14 {dimension_numbers = #tpu.dot_dimension_numbers<[1], [0], [0], [1], [0, 0, 1, 1], [], []>} : vector<2x37xf32>, vector<37x64xf32>, vector<2x64xf32> -> vector<2x64xf32>
    %c2 = arith.constant 2 : index
    %c0_15 = arith.constant 0 : index
    %42 = vector.load %arg4[%c2, %c0_15] : memref<6x64xf32, #tpu.memory_space<vmem>>, vector<1x64xf32>
    %43 = vector.broadcast %42 : vector<1x64xf32> to vector<2x64xf32>
    %44 = arith.addf %41, %43 : vector<2x64xf32>
    %cst_16 = arith.constant 0.000000e+00 : f32
    %45 = vector.broadcast %cst_16 : f32 to vector<2x64xf32>
    %46 = arith.maximumf %44, %45 : vector<2x64xf32>
    %c0_17 = arith.constant 0 : index
    %c0_18 = arith.constant 0 : index
    %47 = vector.load %arg3[%c0_17, %c0_18] : memref<192x64xf32, #tpu.memory_space<vmem>>, vector<64x64xf32>
    %cst_19 = arith.constant dense<0.000000e+00> : vector<2x64xf32>
    %48 = tpu.matmul %46, %47, %cst_19 {dimension_numbers = #tpu.dot_dimension_numbers<[1], [0], [0], [1], [0, 0, 1, 1], [], []>} : vector<2x64xf32>, vector<64x64xf32>, vector<2x64xf32> -> vector<2x64xf32>
    %c3 = arith.constant 3 : index
    %c0_20 = arith.constant 0 : index
    %49 = vector.load %arg4[%c3, %c0_20] : memref<6x64xf32, #tpu.memory_space<vmem>>, vector<1x64xf32>
    %50 = vector.broadcast %49 : vector<1x64xf32> to vector<2x64xf32>
    %51 = arith.addf %48, %50 : vector<2x64xf32>
    %52 = math.tanh %51 : vector<2x64xf32>
    %c64 = arith.constant 64 : index
    %c0_21 = arith.constant 0 : index
    %53 = vector.load %arg3[%c64, %c0_21] : memref<192x64xf32, #tpu.memory_space<vmem>>, vector<64x64xf32>
    %cst_22 = arith.constant dense<0.000000e+00> : vector<2x64xf32>
    %54 = tpu.matmul %52, %53, %cst_22 {dimension_numbers = #tpu.dot_dimension_numbers<[1], [0], [0], [1], [0, 0, 1, 1], [], []>} : vector<2x64xf32>, vector<64x64xf32>, vector<2x64xf32> -> vector<2x64xf32>
    %c4 = arith.constant 4 : index
    %c0_23 = arith.constant 0 : index
    %55 = vector.load %arg4[%c4, %c0_23] : memref<6x64xf32, #tpu.memory_space<vmem>>, vector<1x64xf32>
    %56 = vector.broadcast %55 : vector<1x64xf32> to vector<2x64xf32>
    %57 = arith.addf %54, %56 : vector<2x64xf32>
    %58 = math.tanh %57 : vector<2x64xf32>
    %c128 = arith.constant 128 : index
    %c0_24 = arith.constant 0 : index
    %59 = vector.load %arg3[%c128, %c0_24] : memref<192x64xf32, #tpu.memory_space<vmem>>, vector<64x7xf32>
    %cst_25 = arith.constant dense<0.000000e+00> : vector<2x7xf32>
    %60 = tpu.matmul %58, %59, %cst_25 {dimension_numbers = #tpu.dot_dimension_numbers<[1], [0], [0], [1], [0, 0, 1, 1], [], []>} : vector<2x64xf32>, vector<64x7xf32>, vector<2x7xf32> -> vector<2x7xf32>
    %c5 = arith.constant 5 : index
    %c0_26 = arith.constant 0 : index
    %61 = vector.load %arg4[%c5, %c0_26] : memref<6x64xf32, #tpu.memory_space<vmem>>, vector<1x7xf32>
    %62 = vector.broadcast %61 : vector<1x7xf32> to vector<2x7xf32>
    %63 = arith.addf %60, %62 : vector<2x7xf32>
    %cst_27 = arith.constant dense<0xFF800000> : vector<2xf32>
    %64 = vector.multi_reduction <maximumf>, %63, %cst_27 [1] : vector<2x7xf32> to vector<2xf32>
    %65 = vector.shape_cast %64 : vector<2xf32> to vector<2x1xf32>
    %66 = vector.broadcast %65 : vector<2x1xf32> to vector<2x7xf32>
    %67 = arith.subf %63, %66 : vector<2x7xf32>
    %68 = math.exp %67 : vector<2x7xf32>
    %cst_28 = arith.constant dense<0.000000e+00> : vector<2xf32>
    %69 = vector.multi_reduction <add>, %68, %cst_28 [1] : vector<2x7xf32> to vector<2xf32>
    %70 = vector.shape_cast %69 : vector<2xf32> to vector<2x1xf32>
    %71 = math.log %70 : vector<2x1xf32>
    %72 = vector.broadcast %71 : vector<2x1xf32> to vector<2x7xf32>
    %73 = arith.subf %67, %72 : vector<2x7xf32>
    %c0_29 = arith.constant 0 : index
    %c0_30 = arith.constant 0 : index
    %74 = vector.load %arg5[%c0_29, %c0_30] : memref<2x7xf32, #tpu.memory_space<vmem>>, vector<2x7xf32>
    tpu.vector_store %arg5[%c0_29, %c0_30], %73 {strides = array<i32>} : memref<2x7xf32, #tpu.memory_space<vmem>>, vector<2x7xf32>,
    %75 = tpu.iota {dimensions = array<i32: 1>} : vector<2x7xi32>
    %c0_31 = arith.constant 0 : index
    %c0_32 = arith.constant 0 : index
    %76 = vector.load %arg1[%c0_31, %c0_32] : memref<2x1xi32, #tpu.memory_space<vmem>>, vector<2x1xi32>
    %77 = vector.broadcast %76 : vector<2x1xi32> to vector<2x7xi32>
    %78 = arith.cmpi eq, %75, %77 : vector<2x7xi32>
    %cst_33 = arith.constant 1.000000e+00 : f32
    %cst_34 = arith.constant 0.000000e+00 : f32
    %79 = vector.broadcast %cst_33 : f32 to vector<2x7xf32>
    %80 = vector.broadcast %cst_34 : f32 to vector<2x7xf32>
    %81 = arith.select %78, %79, %80 : vector<2x7xi1>, vector<2x7xf32>
    %82 = arith.mulf %73, %81 : vector<2x7xf32>
    %cst_35 = arith.constant dense<0.000000e+00> : vector<2xf32>
    %83 = vector.multi_reduction <add>, %82, %cst_35 [1] : vector<2x7xf32> to vector<2xf32>
    %84 = vector.shape_cast %83 : vector<2xf32> to vector<2x1xf32>
    %c0_36 = arith.constant 0 : index
    %c0_37 = arith.constant 0 : index
    %85 = vector.load %arg6[%c0_36, %c0_37] : memref<2x1xf32, #tpu.memory_space<vmem>>, vector<2x1xf32>
    tpu.vector_store %arg6[%c0_36, %c0_37], %84 {strides = array<i32>} : memref<2x1xf32, #tpu.memory_space<vmem>>, vector<2x1xf32>,
    return
  }
}

</mosaic_0001>

<llo_original>
// kernel: disc_model_forward.1
$region0: #{disc_model_forward.1}
  #allocation0 [shape = 'u32[]', space=smem, size = 0x4, offset = 0x4, fixed_abs, tag = 'smem constant byte address 0x4 - core index']
  #allocation1 [shape = 'u32[144,128]{1,0:T(1,128)}', space=vmem, size = 0x12000, scoped, tag = 'internal scratch']
  %s0 = inlined_call_operand.vmem [shape: f32[72,12], index: 0, kind: input, shape index: {}]
  %s1 = inlined_call_operand.vmem [shape: s32[2,1], index: 1, kind: input, shape index: {}]
  %s2 = inlined_call_operand.vmem [shape: f32[208,64], index: 2, kind: input, shape index: {}]
  %s3 = inlined_call_operand.vmem [shape: f32[192,64], index: 3, kind: input, shape index: {}]
  %s4 = inlined_call_operand.vmem [shape: f32[6,64], index: 4, kind: input, shape index: {}]
  %s5 = inlined_call_operand.hbm [shape: f32[2,7], index: 5, kind: output, shape index: {0}]
  %s6 = inlined_call_operand.vmem [shape: f32[2,1], index: 6, kind: output, shape index: {1}]
  %7 = xla_tuple %s5, %s6
  %s8 = sld [smem:[#allocation0]]
  $region38: #{disc_model_forward.1} parent=0
    _
  %s10 = ssub.s32 1, %s8
  %s11 = scalar_select 0, %s10, %s8
  $region1: #{disc_model_forward.1} parent=0
    #allocation2 [shape = 'u8[1024]{0}', space=vmem, size = 0x400, scoped, tag = 'output window, operand 0, single buffered']
    #allocation3 [shape = 's32[1]{0}', space=sflag, size = 0x4, scoped, tag = 'scoped memory for disc_model_forward.1']
    %12 = vsyncpa [#allocation3], 0
    // Predicated region
    $region2: #{disc_model_forward.1} parent=1 // pred_check
      _
    $region3: #{disc_model_forward.1} parent=1 // pred_check_branch
      %14 = sbr.rel (0) target = $region5
    $region4: #{disc_model_forward.1} parent=1 // pred_region
      _
    $region5: #{disc_model_forward.1} parent=1 // pred_fallthru
      _
    // Predicated region
    $region6: #{disc_model_forward.1} parent=1 // pred_check
      _
    $region7: #{disc_model_forward.1} parent=1 // pred_check_branch
      %16 = sbr.rel (0) target = $region9
    $region8: #{disc_model_forward.1} parent=1 // pred_region
      _
    $region9: #{disc_model_forward.1} parent=1 // pred_fallthru
      _
    // Predicated region
    $region10: #{disc_model_forward.1} parent=1 // pred_check
      _
    $region11: #{disc_model_forward.1} parent=1 // pred_check_branch
      %18 = sbr.rel (0) target = $region13
    $region12: #{disc_model_forward.1} parent=1 // pred_region
      _
    $region13: #{disc_model_forward.1} parent=1 // pred_fallthru
      _
    // Predicated region
    $region14: #{disc_model_forward.1} parent=1 // pred_check
      _
    $region15: #{disc_model_forward.1} parent=1 // pred_check_branch
      %20 = sbr.rel (0) target = $region17
    $region16: #{disc_model_forward.1} parent=1 // pred_region
      _
    $region17: #{disc_model_forward.1} parent=1 // pred_fallthru
      _
    // Predicated region
    $region18: #{disc_model_forward.1} parent=1 // pred_check
      _
    $region19: #{disc_model_forward.1} parent=1 // pred_check_branch
      %22 = sbr.rel (0) target = $region21
    $region20: #{disc_model_forward.1} parent=1 // pred_region
      _
    $region21: #{disc_model_forward.1} parent=1 // pred_fallthru
      _
    %v23 = vld [vmem:[%s2] sm:$0xff]
    %v24 = vld [vmem:[%s2 + $0x8] sm:$0xf]
    %v25 = vld [vmem:[%s0] sm:$0xff]
    %v26 = vld [vmem:[%s0 + $0x8] sm:$0xff]
    %v27 = vld [vmem:[%s0 + $0x10] sm:$0xff]
    %v28 = vld [vmem:[%s0 + $0x18] sm:$0xff]
    %v29 = vld [vmem:[%s0 + $0x20] sm:$0xff]
    %v30 = vld [vmem:[%s0 + $0x28] sm:$0xff]
    %v31 = vld [vmem:[%s0 + $0x30] sm:$0xff]
    %v32 = vld [vmem:[%s0 + $0x38] sm:$0xff]
    %v33 = vld [vmem:[%s0 + $0x40] sm:$0xff]
    %v34 = vld [vmem:[%s4] sm:$0x1]
    %v35 = vlaneseq
    %v36 = vshrl.u32 %v35, 7
    %v37 = vsub.s32 0, %v36
    %v38 = vrot.slane %v34, %v37
    %vm39 = vcmask 97280
    %v41 = vsel %vm39, %v25, 0
    %v44 = vsel %vm39, %v26, 0
    %v47 = vsel %vm39, %v27, 0
    %v50 = vsel %vm39, %v28, 0
    %v53 = vsel %vm39, %v29, 0
    %v56 = vsel %vm39, %v30, 0
    %v59 = vsel %vm39, %v31, 0
    %v62 = vsel %vm39, %v32, 0
    %v65 = vsel %vm39, %v33, 0
    %vm67 = vcmask 1043456
    %v69 = vsel %vm67, %v24, 0
    %71 = vmatprep.subr.mxu0 0.0
    %72 = vmatpush1.msra.mxu0 0.0
    %73 = vmatprep.subr.mxu0 0.0
    %74 = vmatpush1.msra.mxu0 0.0
    %75 = vmatprep.subr.mxu0 0.0
    %76 = vmatpush1.msra.mxu0 0.0
    %77 = vmatprep.subr.mxu0 0.0
    %78 = vmatpush1.msra.mxu0 0.0
    %79 = vmatprep.subr.mxu0 0.0
    %80 = vmatpush1.msra.mxu0 0.0
    %81 = vmatprep.subr.mxu0 0.0
    %82 = vmatpush1.msra.mxu0 0.0
    %83 = vmatprep.subr.mxu0 0.0
    %84 = vmatpush1.msra.mxu0 0.0
    %85 = vmatprep.subr.mxu0 0.0
    %86 = vmatpush1.msra.mxu0 0.0
    %87 = vmatprep.subr.mxu0 0.0
    %88 = vmatpush1.msra.mxu0 0.0
    %89 = vmatprep.subr.mxu0 0.0
    %90 = vmatpush1.msra.mxu0 0.0
    %91 = vmatprep.subr.mxu0 0.0
    %92 = vmatpush1.msra.mxu0 0.0
    %93 = vmatprep.subr.mxu0 0.0
    %94 = vmatpush1.msra.mxu0 0.0
    %95 = vmatprep.subr.mxu0 0.0
    %96 = vmatpush1.msra.mxu0 0.0
    %97 = vmatprep.subr.mxu0 0.0
    %98 = vmatpush1.msra.mxu0 0.0
    %99 = vmatprep.subr.mxu0 0.0
    %100 = vmatpush1.msra.mxu0 %v69
    %101 = vmatprep.subr.mxu0 0.0
    %102 = vmatpush1.msra.mxu0 %v23
    %103 = vmatprep.subr.mxu0 0.0
    %104 = vmatpush2.msra.mxu0 0.0
    %105 = vmatprep.subr.mxu0 0.0
    %106 = vmatpush2.msra.mxu0 0.0
    %107 = vmatprep.subr.mxu0 0.0
    %108 = vmatpush2.msra.mxu0 0.0
    %109 = vmatprep.subr.mxu0 0.0
    %110 = vmatpush2.msra.mxu0 0.0
    %111 = vmatprep.subr.mxu0 0.0
    %112 = vmatpush2.msra.mxu0 0.0
    %113 = vmatprep.subr.mxu0 0.0
    %114 = vmatpush2.msra.mxu0 0.0
    %115 = vmatprep.subr.mxu0 0.0
    %116 = vmatpush2.msra.mxu0 0.0
    %117 = vmatprep.subr.mxu0 0.0
    %118 = vmatpush2.msra.mxu0 0.0
    %119 = vmatprep.subr.mxu0 0.0
    %120 = vmatpush2.msra.mxu0 0.0
    %121 = vmatprep.subr.mxu0 0.0
    %122 = vmatpush2.msra.mxu0 0.0
    %123 = vmatprep.subr.mxu0 0.0
    %124 = vmatpush2.msra.mxu0 0.0
    %125 = vmatprep.subr.mxu0 0.0
    %126 = vmatpush2.msra.mxu0 0.0
    %127 = vmatprep.subr.mxu0 0.0
    %128 = vmatpush2.msra.mxu0 0.0
    %129 = vmatprep.subr.mxu0 0.0
    %130 = vmatpush2.msra.mxu0 0.0
    %131 = vmatprep.subr.mxu0 0.0
    %132 = vmatpush2.msra.mxu0 0.0
    %133 = vmatprep.subr.mxu0 0.0
    %134 = vmatpush2.msra.mxu0 0.0
    %135 = vmatprep.mubr.f32.mxu0 0.0
    %136 = vmatmul.mubr.f32.gmra.mxu0 %v41
    %v137 = vpop.f32.mrf.mxu0
    %v138 = vadd.f32 %v38, %v137
    %v139 = vpop.f32.mrf.mxu0
    %140 = vmatprep.mubr.f32.mxu0 0.0
    %141 = vmatmul.mubr.f32.gmra.mxu0 %v44
    %v142 = vpop.f32.mrf.mxu0
    %v143 = vadd.f32 %v38, %v142
    %v144 = vpop.f32.mrf.mxu0
    %145 = vmatprep.mubr.f32.mxu0 0.0
    %146 = vmatmul.mubr.f32.gmra.mxu0 %v47
    %v147 = vpop.f32.mrf.mxu0
    %v148 = vadd.f32 %v38, %v147
    %v149 = vpop.f32.mrf.mxu0
    %150 = vmatprep.mubr.f32.mxu0 0.0
    %151 = vmatmul.mubr.f32.gmra.mxu0 %v50
    %v152 = vpop.f32.mrf.mxu0
    %v153 = vadd.f32 %v38, %v152
    %v154 = vpop.f32.mrf.mxu0
    %155 = vmatprep.mubr.f32.mxu0 0.0
    %156 = vmatmul.mubr.f32.gmra.mxu0 %v53
    %v157 = vpop.f32.mrf.mxu0
    %v158 = vadd.f32 %v38, %v157
    %v159 = vpop.f32.mrf.mxu0
    %160 = vmatprep.mubr.f32.mxu0 0.0
    %161 = vmatmul.mubr.f32.gmra.mxu0 %v56
    %v162 = vpop.f32.mrf.mxu0
    %v163 = vadd.f32 %v38, %v162
    %v164 = vpop.f32.mrf.mxu0
    %165 = vmatprep.mubr.f32.mxu0 0.0
    %166 = vmatmul.mubr.f32.gmra.mxu0 %v59
    %v167 = vpop.f32.mrf.mxu0
    %v168 = vadd.f32 %v38, %v167
    %v169 = vpop.f32.mrf.mxu0
    %170 = vmatprep.mubr.f32.mxu0 0.0
    %171 = vmatmul.mubr.f32.gmra.mxu0 %v62
    %v172 = vpop.f32.mrf.mxu0
    %v173 = vadd.f32 %v38, %v172
    %v174 = vpop.f32.mrf.mxu0
    %175 = vmatprep.mubr.f32.mxu0 0.0
    %176 = vmatmul.mubr.f32.gmra.mxu0 %v65
    %v177 = vpop.f32.mrf.mxu0
    %v178 = vadd.f32 %v38, %v177
    %v179 = vpop.f32.mrf.mxu0
    %180 = vdwg.mxu0
    %v181 = vmax.f32 %v138, 0.0
    %v182 = vmax.f32 %v143, 0.0
    %v183 = vmax.f32 %v148, 0.0
    %v184 = vmax.f32 %v153, 0.0
    %v185 = vmax.f32 %v158, 0.0
    %v186 = vmax.f32 %v163, 0.0
    %v187 = vmax.f32 %v168, 0.0
    %v188 = vmax.f32 %v173, 0.0
    %v189 = vmax.f32 %v178, 0.0
    %vm199 = vcmask 1046528
    %v200 = vrot.slane %v181, 1
    %v201 = vrot.slane %v182, 1
    %v202 = vsel %vm199, %v200, %v201
    %v203 = vrot.slane %v183, 1
    %v204 = vsel %vm199, %v201, %v203
    %v205 = vrot.slane %v184, 1
    %v206 = vsel %vm199, %v203, %v205
    %v207 = vrot.slane %v185, 1
    %v208 = vsel %vm199, %v205, %v207
    %v209 = vrot.slane %v186, 1
    %v210 = vsel %vm199, %v207, %v209
    %v211 = vrot.slane %v187, 1
    %v212 = vsel %vm199, %v209, %v211
    %v213 = vrot.slane %v188, 1
    %v214 = vsel %vm199, %v211, %v213
    %v215 = vrot.slane %v189, 1
    %v216 = vsel %vm199, %v213, %v215
    %v226 = vmax.f32 %v181, %v202
    %v227 = vmax.f32 %v182, %v204
    %v228 = vmax.f32 %v183, %v206
    %v229 = vmax.f32 %v184, %v208
    %v230 = vmax.f32 %v185, %v210
    %v231 = vmax.f32 %v186, %v212
    %v232 = vmax.f32 %v187, %v214
    %v233 = vmax.f32 %v188, %v216
    %v234 = vmax.f32 %v189, %v215
    %vm244 = vcmask 1041408
    %v245 = vrot.slane %v226, 6
    %v246 = vrot.slane %v227, 6
    %v247 = vsel %vm244, %v245, %v246
    %v248 = vrot.slane %v228, 6
    %v249 = vsel %vm244, %v246, %v248
    %v250 = vrot.slane %v229, 6
    %v251 = vsel %vm244, %v248, %v250
    %v252 = vrot.slane %v230, 6
    %v253 = vsel %vm244, %v250, %v252
    %v254 = vrot.slane %v231, 6
    %v255 = vsel %vm244, %v252, %v254
    %v256 = vrot.slane %v232, 6
    %v257 = vsel %vm244, %v254, %v256
    %v258 = vrot.slane %v233, 6
    %v259 = vsel %vm244, %v256, %v258
    %v260 = vrot.slane %v234, 6
    %v261 = vsel %vm244, %v258, %v260
    %v271 = vmax.f32 %v226, %v247
    %v272 = vmax.f32 %v227, %v249
    %v273 = vmax.f32 %v228, %v251
    %v274 = vmax.f32 %v229, %v253
    %v275 = vmax.f32 %v230, %v255
    %v276 = vmax.f32 %v231, %v257
    %v277 = vmax.f32 %v232, %v259
    %v278 = vmax.f32 %v233, %v261
    %v279 = vmax.f32 %v234, %v260
    %v280 = vld [vmem:[%s2 + $0x10] sm:$0xff]
    %v281 = vld [vmem:[%s2 + $0x18] sm:$0xff]
    %v282 = vld [vmem:[%s2 + $0x20] sm:$0xff]
    %v283 = vld [vmem:[%s2 + $0x28] sm:$0xff]
    %v284 = vld [vmem:[%s2 + $0x30] sm:$0xff]
    %v285 = vld [vmem:[%s2 + $0x38] sm:$0xff]
    %v286 = vld [vmem:[%s2 + $0x40] sm:$0xff]
    %v287 = vld [vmem:[%s2 + $0x48] sm:$0xff]
    %vm295 = vcmask 1045504
    %v296 = vrot.slane %v271, 2
    %v297 = vrot.slane %v272, 2
    %v298 = vsel %vm295, %v296, %v297
    %v299 = vrot.slane %v273, 2
    %v300 = vsel %vm295, %v297, %v299
    %v301 = vrot.slane %v274, 2
    %v302 = vsel %vm295, %v299, %v301
    %v303 = vrot.slane %v275, 2
    %v304 = vsel %vm295, %v301, %v303
    %v305 = vrot.slane %v276, 2
    %v306 = vsel %vm295, %v303, %v305
    %v307 = vrot.slane %v277, 2
    %v308 = vsel %vm295, %v305, %v307
    %309 = vrot.lane.b32.xlu0 %v298, 16
    %v310 = vpop.permute.xlu0 %309
    %311 = vrot.lane.b32.xlu0 %v300, 16
    %v312 = vpop.permute.xlu0 %311
    %313 = vrot.lane.b32.xlu0 %v302, 16
    %v314 = vpop.permute.xlu0 %313
    %315 = vrot.lane.b32.xlu0 %v304, 16
    %v316 = vpop.permute.xlu0 %315
    %317 = vrot.lane.b32.xlu0 %v306, 16
    %v318 = vpop.permute.xlu0 %317
    %319 = vrot.lane.b32.xlu0 %v308, 16
    %v320 = vpop.permute.xlu0 %319
    %321 = vrot.lane.b32.xlu0 %v307, 16
    %v322 = vpop.permute.xlu0 %321
    %v331 = vrot.slane %v272, 4
    %v332 = vrot.slane %v273, 4
    %v333 = vsel %vm67, %v331, %v332
    %v334 = vrot.slane %v274, 4
    %v335 = vsel %vm67, %v332, %v334
    %v336 = vrot.slane %v275, 4
    %v337 = vsel %vm67, %v334, %v336
    %v338 = vrot.slane %v276, 4
    %v339 = vsel %vm67, %v336, %v338
    %v340 = vrot.slane %v277, 4
    %v341 = vsel %vm67, %v338, %v340
    %v342 = vrot.slane %v278, 4
    %v343 = vsel %vm67, %v340, %v342
    %344 = vrot.lane.b32.xlu0 %v333, 32
    %v345 = vpop.permute.xlu0 %344
    %346 = vrot.lane.b32.xlu0 %v335, 32
    %v347 = vpop.permute.xlu0 %346
    %348 = vrot.lane.b32.xlu0 %v337, 32
    %v349 = vpop.permute.xlu0 %348
    %350 = vrot.lane.b32.xlu0 %v339, 32
    %v351 = vpop.permute.xlu0 %350
    %352 = vrot.lane.b32.xlu0 %v341, 32
    %v353 = vpop.permute.xlu0 %352
    %354 = vrot.lane.b32.xlu0 %v343, 32
    %v355 = vpop.permute.xlu0 %354
    %356 = vrot.lane.b32.xlu0 %v342, 32
    %v357 = vpop.permute.xlu0 %356
    %v366 = vrot.slane %v272, 6
    %v367 = vrot.slane %v273, 6
    %v368 = vsel %vm244, %v366, %v367
    %v369 = vrot.slane %v274, 6
    %v370 = vsel %vm244, %v367, %v369
    %v371 = vrot.slane %v275, 6
    %v372 = vsel %vm244, %v369, %v371
    %v373 = vrot.slane %v276, 6
    %v374 = vsel %vm244, %v371, %v373
    %v375 = vrot.slane %v277, 6
    %v376 = vsel %vm244, %v373, %v375
    %v377 = vrot.slane %v278, 6
    %v378 = vsel %vm244, %v375, %v377
    %v379 = vrot.slane %v279, 6
    %v380 = vsel %vm244, %v377, %v379
    %381 = vrot.lane.b32.xlu0 %v368, 48
    %v382 = vpop.permute.xlu0 %381
    %383 = vrot.lane.b32.xlu0 %v370, 48
    %v384 = vpop.permute.xlu0 %383
    %385 = vrot.lane.b32.xlu0 %v372, 48
    %v386 = vpop.permute.xlu0 %385
    %387 = vrot.lane.b32.xlu0 %v374, 48
    %v388 = vpop.permute.xlu0 %387
    %389 = vrot.lane.b32.xlu0 %v376, 48
    %v390 = vpop.permute.xlu0 %389
    %391 = vrot.lane.b32.xlu0 %v378, 48
    %v392 = vpop.permute.xlu0 %391
    %393 = vrot.lane.b32.xlu0 %v380, 48
    %v394 = vpop.permute.xlu0 %393
    %vm402 = vcmask 130048
    %v403 = vsel %vm402, %v271, %v310
    %v404 = vsel %vm402, %v272, %v312
    %v405 = vsel %vm402, %v273, %v314
    %v406 = vsel %vm402, %v274, %v316
    %v407 = vsel %vm402, %v275, %v318
    %v408 = vsel %vm402, %v276, %v320
    %v409 = vsel %vm402, %v277, %v322
    %vm410 = vcmask 261120
    %v411 = vsel %vm410, %v403, %v345
    %v412 = vsel %vm410, %v404, %v347
    %v413 = vsel %vm410, %v405, %v349
    %v414 = vsel %vm410, %v406, %v351
    %v415 = vsel %vm410, %v407, %v353
    %v416 = vsel %vm410, %v408, %v355
    %v417 = vsel %vm410, %v409, %v357
    %vm418 = vcmask 392192
    %v419 = vsel %vm418, %v411, %v382
    %v420 = vsel %vm418, %v412, %v384
    %v421 = vsel %vm418, %v413, %v386
    %v422 = vsel %vm418, %v414, %v388
    %v423 = vsel %vm418, %v415, %v390
    %v424 = vsel %vm418, %v416, %v392
    %v425 = vsel %vm418, %v417, %v394
    %v426 = vld [vmem:[%s4 + $0x1] sm:$0x1]
    %v427 = vlaneseq
    %v428 = vshrl.u32 %v427, 7
    %v429 = vsub.s32 0, %v428
    %v430 = vrot.slane %v426, %v429
    %vm431 = vcmask 523264
    %v433 = vsel %vm431, %v419, 0
    %v436 = vsel %vm431, %v420, 0
    %v439 = vsel %vm431, %v421, 0
    %v442 = vsel %vm431, %v422, 0
    %v445 = vsel %vm431, %v423, 0
    %v448 = vsel %vm431, %v424, 0
    %v451 = vsel %vm431, %v425, 0
    %453 = vmatprep.subr.mxu0 0.0
    %454 = vmatpush1.msra.mxu0 0.0
    %455 = vmatprep.subr.mxu0 0.0
    %456 = vmatpush1.msra.mxu0 0.0
    %457 = vmatprep.subr.mxu0 0.0
    %458 = vmatpush1.msra.mxu0 0.0
    %459 = vmatprep.subr.mxu0 0.0
    %460 = vmatpush1.msra.mxu0 0.0
    %461 = vmatprep.subr.mxu0 0.0
    %462 = vmatpush1.msra.mxu0 0.0
    %463 = vmatprep.subr.mxu0 0.0
    %464 = vmatpush1.msra.mxu0 0.0
    %465 = vmatprep.subr.mxu0 0.0
    %466 = vmatpush1.msra.mxu0 0.0
    %467 = vmatprep.subr.mxu0 0.0
    %468 = vmatpush1.msra.mxu0 0.0
    %469 = vmatprep.subr.mxu0 0.0
    %470 = vmatpush1.msra.mxu0 %v287
    %471 = vmatprep.subr.mxu0 0.0
    %472 = vmatpush1.msra.mxu0 %v286
    %473 = vmatprep.subr.mxu0 0.0
    %474 = vmatpush1.msra.mxu0 %v285
    %475 = vmatprep.subr.mxu0 0.0
    %476 = vmatpush1.msra.mxu0 %v284
    %477 = vmatprep.subr.mxu0 0.0
    %478 = vmatpush1.msra.mxu0 %v283
    %479 = vmatprep.subr.mxu0 0.0
    %480 = vmatpush1.msra.mxu0 %v282
    %481 = vmatprep.subr.mxu0 0.0
    %482 = vmatpush1.msra.mxu0 %v281
    %483 = vmatprep.subr.mxu0 0.0
    %484 = vmatpush1.msra.mxu0 %v280
    %485 = vmatprep.subr.mxu0 0.0
    %486 = vmatpush2.msra.mxu0 0.0
    %487 = vmatprep.subr.mxu0 0.0
    %488 = vmatpush2.msra.mxu0 0.0
    %489 = vmatprep.subr.mxu0 0.0
    %490 = vmatpush2.msra.mxu0 0.0
    %491 = vmatprep.subr.mxu0 0.0
    %492 = vmatpush2.msra.mxu0 0.0
    %493 = vmatprep.subr.mxu0 0.0
    %494 = vmatpush2.msra.mxu0 0.0
    %495 = vmatprep.subr.mxu0 0.0
    %496 = vmatpush2.msra.mxu0 0.0
    %497 = vmatprep.subr.mxu0 0.0
    %498 = vmatpush2.msra.mxu0 0.0
    %499 = vmatprep.subr.mxu0 0.0
    %500 = vmatpush2.msra.mxu0 0.0
    %501 = vmatprep.subr.mxu0 0.0
    %502 = vmatpush2.msra.mxu0 0.0
    %503 = vmatprep.subr.mxu0 0.0
    %504 = vmatpush2.msra.mxu0 0.0
    %505 = vmatprep.subr.mxu0 0.0
    %506 = vmatpush2.msra.mxu0 0.0
    %507 = vmatprep.subr.mxu0 0.0
    %508 = vmatpush2.msra.mxu0 0.0
    %509 = vmatprep.subr.mxu0 0.0
    %510 = vmatpush2.msra.mxu0 0.0
    %511 = vmatprep.subr.mxu0 0.0
    %512 = vmatpush2.msra.mxu0 0.0
    %513 = vmatprep.subr.mxu0 0.0
    %514 = vmatpush2.msra.mxu0 0.0
    %515 = vmatprep.subr.mxu0 0.0
    %516 = vmatpush2.msra.mxu0 0.0
    %517 = vmatprep.mubr.f32.mxu0 0.0
    %518 = vmatmul.mubr.f32.gmra.mxu0 %v433
    %v519 = vpop.f32.mrf.mxu0
    %v520 = vadd.f32 %v430, %v519
    %v521 = vpop.f32.mrf.mxu0
    %522 = vmatprep.mubr.f32.mxu0 0.0
    %523 = vmatmul.mubr.f32.gmra.mxu0 %v436
    %v524 = vpop.f32.mrf.mxu0
    %v525 = vadd.f32 %v430, %v524
    %v526 = vpop.f32.mrf.mxu0
    %527 = vmatprep.mubr.f32.mxu0 0.0
    %528 = vmatmul.mubr.f32.gmra.mxu0 %v439
    %v529 = vpop.f32.mrf.mxu0
    %v530 = vadd.f32 %v430, %v529
    %v531 = vpop.f32.mrf.mxu0
    %532 = vmatprep.mubr.f32.mxu0 0.0
    %533 = vmatmul.mubr.f32.gmra.mxu0 %v442
    %v534 = vpop.f32.mrf.mxu0
    %v535 = vadd.f32 %v430, %v534
    %v536 = vpop.f32.mrf.mxu0
    %537 = vmatprep.mubr.f32.mxu0 0.0
    %538 = vmatmul.mubr.f32.gmra.mxu0 %v445
    %v539 = vpop.f32.mrf.mxu0
    %v540 = vadd.f32 %v430, %v539
    %v541 = vpop.f32.mrf.mxu0
    %542 = vmatprep.mubr.f32.mxu0 0.0
    %543 = vmatmul.mubr.f32.gmra.mxu0 %v448
    %v544 = vpop.f32.mrf.mxu0
    %v545 = vadd.f32 %v430, %v544
    %v546 = vpop.f32.mrf.mxu0
    %547 = vmatprep.mubr.f32.mxu0 0.0
    %548 = vmatmul.mubr.f32.gmra.mxu0 %v451
    %v549 = vpop.f32.mrf.mxu0
    %v550 = vadd.f32 %v430, %v549
    %v551 = vpop.f32.mrf.mxu0
    %552 = vdwg.mxu0
    %v553 = vmax.f32 %v520, 0.0
    %v554 = vmax.f32 %v525, 0.0
    %v555 = vmax.f32 %v530, 0.0
    %v556 = vmax.f32 %v535, 0.0
    %v557 = vmax.f32 %v540, 0.0
    %v558 = vmax.f32 %v545, 0.0
    %v559 = vmax.f32 %v550, 0.0
    %v560 = vld [vmem:[%s2 + $0x50] sm:$0xff]
    %v561 = vld [vmem:[%s2 + $0x58] sm:$0xff]
    %v562 = vld [vmem:[%s2 + $0x60] sm:$0xff]
    %v563 = vld [vmem:[%s2 + $0x68] sm:$0xff]
    %v564 = vld [vmem:[%s2 + $0x70] sm:$0xff]
    %v565 = vld [vmem:[%s2 + $0x78] sm:$0xff]
    %v566 = vld [vmem:[%s2 + $0x80] sm:$0xff]
    %v567 = vld [vmem:[%s2 + $0x88] sm:$0xff]
    %v568 = vld [vmem:[%s2 + $0x90] sm:$0xff]
    %v569 = vld [vmem:[%s2 + $0x98] sm:$0xff]
    %v570 = vld [vmem:[%s2 + $0xa0] sm:$0xff]
    %v571 = vld [vmem:[%s2 + $0xa8] sm:$0xff]
    %v572 = vld [vmem:[%s2 + $0xb0] sm:$0xff]
    %v573 = vld [vmem:[%s2 + $0xb8] sm:$0xff]
    %v574 = vld [vmem:[%s2 + $0xc0] sm:$0xff]
    %v575 = vld [vmem:[%s2 + $0xc8] sm:$0xff]
    %v581 = vrot.slane %v553, 2
    %v582 = vrot.slane %v554, 2
    %v583 = vsel %vm295, %v581, %v582
    %v584 = vrot.slane %v555, 2
    %v585 = vsel %vm295, %v582, %v584
    %v586 = vrot.slane %v556, 2
    %v587 = vsel %vm295, %v584, %v586
    %v588 = vrot.slane %v557, 2
    %v589 = vsel %vm295, %v586, %v588
    %590 = vrot.lane.b32.xlu0 %v583, 32
    %v591 = vpop.permute.xlu0 %590
    %592 = vrot.lane.b32.xlu0 %v585, 32
    %v593 = vpop.permute.xlu0 %592
    %594 = vrot.lane.b32.xlu0 %v587, 32
    %v595 = vpop.permute.xlu0 %594
    %596 = vrot.lane.b32.xlu0 %v589, 32
    %v597 = vpop.permute.xlu0 %596
    %598 = vrot.lane.b32.xlu0 %v588, 32
    %v599 = vpop.permute.xlu0 %598
    %v607 = vrot.slane %v554, 4
    %v608 = vrot.slane %v555, 4
    %v609 = vsel %vm67, %v607, %v608
    %v610 = vrot.slane %v556, 4
    %v611 = vsel %vm67, %v608, %v610
    %v612 = vrot.slane %v557, 4
    %v613 = vsel %vm67, %v610, %v612
    %v614 = vrot.slane %v558, 4
    %v615 = vsel %vm67, %v612, %v614
    %v616 = vrot.slane %v559, 4
    %v617 = vsel %vm67, %v614, %v616
    %618 = vrot.lane.b32.xlu0 %v609, 64
    %v619 = vpop.permute.xlu0 %618
    %620 = vrot.lane.b32.xlu0 %v611, 64
    %v621 = vpop.permute.xlu0 %620
    %622 = vrot.lane.b32.xlu0 %v613, 64
    %v623 = vpop.permute.xlu0 %622
    %624 = vrot.lane.b32.xlu0 %v615, 64
    %v625 = vpop.permute.xlu0 %624
    %626 = vrot.lane.b32.xlu0 %v617, 64
    %v627 = vpop.permute.xlu0 %626
    %v633 = vrot.slane %v554, 6
    %v634 = vrot.slane %v555, 6
    %v635 = vsel %vm244, %v633, %v634
    %v636 = vrot.slane %v556, 6
    %v637 = vsel %vm244, %v634, %v636
    %v638 = vrot.slane %v557, 6
    %v639 = vsel %vm244, %v636, %v638
    %v640 = vrot.slane %v558, 6
    %v641 = vsel %vm244, %v638, %v640
    %v642 = vrot.slane %v559, 6
    %v643 = vsel %vm244, %v640, %v642
    %644 = vrot.lane.b32.xlu0 %v635, 96
    %v645 = vpop.permute.xlu0 %644
    %646 = vrot.lane.b32.xlu0 %v637, 96
    %v647 = vpop.permute.xlu0 %646
    %648 = vrot.lane.b32.xlu0 %v639, 96
    %v649 = vpop.permute.xlu0 %648
    %650 = vrot.lane.b32.xlu0 %v641, 96
    %v651 = vpop.permute.xlu0 %650
    %652 = vrot.lane.b32.xlu0 %v643, 96
    %v653 = vpop.permute.xlu0 %652
    %v659 = vsel %vm410, %v553, %v591
    %v660 = vsel %vm410, %v554, %v593
    %v661 = vsel %vm410, %v555, %v595
    %v662 = vsel %vm410, %v556, %v597
    %v663 = vsel %vm410, %v557, %v599
    %v664 = vsel %vm431, %v659, %v619
    %v665 = vsel %vm431, %v660, %v621
    %v666 = vsel %vm431, %v661, %v623
    %v667 = vsel %vm431, %v662, %v625
    %v668 = vsel %vm431, %v663, %v627
    %vm669 = vcmask 785408
    %v670 = vsel %vm669, %v664, %v645
    %v671 = vsel %vm669, %v665, %v647
    %v672 = vsel %vm669, %v666, %v649
    %v673 = vsel %vm669, %v667, %v651
    %v674 = vsel %vm669, %v668, %v653
    %675 = vmatprep.subr.mxu0 0.0
    %676 = vmatpush1.msra.mxu0 %v575
    %677 = vmatprep.subr.mxu0 0.0
    %678 = vmatpush1.msra.mxu0 %v574
    %679 = vmatprep.subr.mxu0 0.0
    %680 = vmatpush1.msra.mxu0 %v573
    %681 = vmatprep.subr.mxu0 0.0
    %682 = vmatpush1.msra.mxu0 %v572
    %683 = vmatprep.subr.mxu0 0.0
    %684 = vmatpush1.msra.mxu0 %v571
    %685 = vmatprep.subr.mxu0 0.0
    %686 = vmatpush1.msra.mxu0 %v570
    %687 = vmatprep.subr.mxu0 0.0
    %688 = vmatpush1.msra.mxu0 %v569
    %689 = vmatprep.subr.mxu0 0.0
    %690 = vmatpush1.msra.mxu0 %v568
    %691 = vmatprep.subr.mxu0 0.0
    %692 = vmatpush1.msra.mxu0 %v567
    %693 = vmatprep.subr.mxu0 0.0
    %694 = vmatpush1.msra.mxu0 %v566
    %695 = vmatprep.subr.mxu0 0.0
    %696 = vmatpush1.msra.mxu0 %v565
    %697 = vmatprep.subr.mxu0 0.0
    %698 = vmatpush1.msra.mxu0 %v564
    %699 = vmatprep.subr.mxu0 0.0
    %700 = vmatpush1.msra.mxu0 %v563
    %701 = vmatprep.subr.mxu0 0.0
    %702 = vmatpush1.msra.mxu0 %v562
    %703 = vmatprep.subr.mxu0 0.0
    %704 = vmatpush1.msra.mxu0 %v561
    %705 = vmatprep.subr.mxu0 0.0
    %706 = vmatpush1.msra.mxu0 %v560
    %707 = vmatprep.subr.mxu0 0.0
    %708 = vmatpush2.msra.mxu0 0.0
    %709 = vmatprep.subr.mxu0 0.0
    %710 = vmatpush2.msra.mxu0 0.0
    %711 = vmatprep.subr.mxu0 0.0
    %712 = vmatpush2.msra.mxu0 0.0
    %713 = vmatprep.subr.mxu0 0.0
    %714 = vmatpush2.msra.mxu0 0.0
    %715 = vmatprep.subr.mxu0 0.0
    %716 = vmatpush2.msra.mxu0 0.0
    %717 = vmatprep.subr.mxu0 0.0
    %718 = vmatpush2.msra.mxu0 0.0
    %719 = vmatprep.subr.mxu0 0.0
    %720 = vmatpush2.msra.mxu0 0.0
    %721 = vmatprep.subr.mxu0 0.0
    %722 = vmatpush2.msra.mxu0 0.0
    %723 = vmatprep.subr.mxu0 0.0
    %724 = vmatpush2.msra.mxu0 0.0
    %725 = vmatprep.subr.mxu0 0.0
    %726 = vmatpush2.msra.mxu0 0.0
    %727 = vmatprep.subr.mxu0 0.0
    %728 = vmatpush2.msra.mxu0 0.0
    %729 = vmatprep.subr.mxu0 0.0
    %730 = vmatpush2.msra.mxu0 0.0
    %731 = vmatprep.subr.mxu0 0.0
    %732 = vmatpush2.msra.mxu0 0.0
    %733 = vmatprep.subr.mxu0 0.0
    %734 = vmatpush2.msra.mxu0 0.0
    %735 = vmatprep.subr.mxu0 0.0
    %736 = vmatpush2.msra.mxu0 0.0
    %737 = vmatprep.subr.mxu0 0.0
    %738 = vmatpush2.msra.mxu0 0.0
    %739 = vmatprep.mubr.f32.mxu0 0.0
    %740 = vmatmul.mubr.f32.gmra.mxu0 %v670
    %v741 = vpop.f32.mrf.mxu0
    %v742 = vadd.f32 0.0, %v741
    %v743 = vpop.f32.mrf.mxu0
    %744 = vmatprep.mubr.f32.mxu0 0.0
    %745 = vmatmul.mubr.f32.gmra.mxu0 %v671
    %v746 = vpop.f32.mrf.mxu0
    %v747 = vadd.f32 0.0, %v746
    %v748 = vpop.f32.mrf.mxu0
    %749 = vmatprep.mubr.f32.mxu0 0.0
    %750 = vmatmul.mubr.f32.gmra.mxu0 %v672
    %v751 = vpop.f32.mrf.mxu0
    %v752 = vadd.f32 0.0, %v751
    %v753 = vpop.f32.mrf.mxu0
    %754 = vmatprep.mubr.f32.mxu0 0.0
    %755 = vmatmul.mubr.f32.gmra.mxu0 %v673
    %v756 = vpop.f32.mrf.mxu0
    %v757 = vadd.f32 0.0, %v756
    %v758 = vpop.f32.mrf.mxu0
    %759 = vmatprep.mubr.f32.mxu0 0.0
    %760 = vmatmul.mubr.f32.gmra.mxu0 %v674
    %v761 = vpop.f32.mrf.mxu0
    %v762 = vadd.f32 0.0, %v761
    %v763 = vpop.f32.mrf.mxu0
    %764 = vdwg.mxu0
    %v765 = vlaneseq
    %v766 = vand.u32 %v765, 127
    %v767 = vlaneseq
    %v768 = vshrl.u32 %v767, 7
    %v769 = vmul.u32 %v768, 36
    %vm770 = vcmp.eq.s32.totalorder %v766, %v769
    %v771 = vsel %vm770, 1.0, 0.0
    %v772 = vld [vmem:[%s4 + $0x2] sm:$0x1]
    %v773 = vlaneseq
    %v774 = vshrl.u32 %v773, 7
    %v775 = vsub.s32 0, %v774
    %v776 = vrot.slane %v772, %v775
    %vm777 = vcmask 302080
    %v779 = vsel %vm777, %v771, 0
    %vm781 = vcmask 1044480
    %v783 = vsel %vm781, %v762, 0
    %785 = vmatprep.subr.mxu0 0.0
    %786 = vmatpush1.msra.mxu0 0.0
    %787 = vmatprep.subr.mxu0 0.0
    %788 = vmatpush1.msra.mxu0 0.0
    %789 = vmatprep.subr.mxu0 0.0
    %790 = vmatpush1.msra.mxu0 0.0
    %791 = vmatprep.subr.mxu0 0.0
    %792 = vmatpush1.msra.mxu0 0.0
    %793 = vmatprep.subr.mxu0 0.0
    %794 = vmatpush1.msra.mxu0 0.0
    %795 = vmatprep.subr.mxu0 0.0
    %796 = vmatpush1.msra.mxu0 0.0
    %797 = vmatprep.subr.mxu0 0.0
    %798 = vmatpush1.msra.mxu0 0.0
    %799 = vmatprep.subr.mxu0 0.0
    %800 = vmatpush1.msra.mxu0 0.0
    %801 = vmatprep.subr.mxu0 0.0
    %802 = vmatpush1.msra.mxu0 0.0
    %803 = vmatprep.subr.mxu0 0.0
    %804 = vmatpush1.msra.mxu0 0.0
    %805 = vmatprep.subr.mxu0 0.0
    %806 = vmatpush1.msra.mxu0 0.0
    %807 = vmatprep.subr.mxu0 0.0
    %808 = vmatpush1.msra.mxu0 %v783
    %809 = vmatprep.subr.mxu0 0.0
    %810 = vmatpush1.msra.mxu0 %v757
    %811 = vmatprep.subr.mxu0 0.0
    %812 = vmatpush1.msra.mxu0 %v752
    %813 = vmatprep.subr.mxu0 0.0
    %814 = vmatpush1.msra.mxu0 %v747
    %815 = vmatprep.subr.mxu0 0.0
    %816 = vmatpush1.msra.mxu0 %v742
    %817 = vmatprep.subr.mxu0 0.0
    %818 = vmatpush2.msra.mxu0 0.0
    %819 = vmatprep.subr.mxu0 0.0
    %820 = vmatpush2.msra.mxu0 0.0
    %821 = vmatprep.subr.mxu0 0.0
    %822 = vmatpush2.msra.mxu0 0.0
    %823 = vmatprep.subr.mxu0 0.0
    %824 = vmatpush2.msra.mxu0 0.0
    %825 = vmatprep.subr.mxu0 0.0
    %826 = vmatpush2.msra.mxu0 0.0
    %827 = vmatprep.subr.mxu0 0.0
    %828 = vmatpush2.msra.mxu0 0.0
    %829 = vmatprep.subr.mxu0 0.0
    %830 = vmatpush2.msra.mxu0 0.0
    %831 = vmatprep.subr.mxu0 0.0
    %832 = vmatpush2.msra.mxu0 0.0
    %833 = vmatprep.subr.mxu0 0.0
    %834 = vmatpush2.msra.mxu0 0.0
    %835 = vmatprep.subr.mxu0 0.0
    %836 = vmatpush2.msra.mxu0 0.0
    %837 = vmatprep.subr.mxu0 0.0
    %838 = vmatpush2.msra.mxu0 0.0
    %839 = vmatprep.subr.mxu0 0.0
    %840 = vmatpush2.msra.mxu0 0.0
    %841 = vmatprep.subr.mxu0 0.0
    %842 = vmatpush2.msra.mxu0 0.0
    %843 = vmatprep.subr.mxu0 0.0
    %844 = vmatpush2.msra.mxu0 0.0
    %845 = vmatprep.subr.mxu0 0.0
    %846 = vmatpush2.msra.mxu0 0.0
    %847 = vmatprep.subr.mxu0 0.0
    %848 = vmatpush2.msra.mxu0 0.0
    %849 = vmatprep.mubr.f32.mxu0 0.0
    %850 = vmatmul.mubr.f32.gmra.mxu0 %v779
    %v851 = vpop.f32.mrf.mxu0
    %v852 = vadd.f32 %v776, %v851
    %v853 = vpop.f32.mrf.mxu0
    %854 = vdwg.mxu0
    %v855 = vmax.f32 %v852, 0.0
    %v856 = vld [vmem:[%s3] sm:$0xff]
    %v857 = vld [vmem:[%s3 + $0x8] sm:$0xff]
    %v858 = vld [vmem:[%s3 + $0x10] sm:$0xff]
    %v859 = vld [vmem:[%s3 + $0x18] sm:$0xff]
    %v860 = vld [vmem:[%s3 + $0x20] sm:$0xff]
    %v861 = vld [vmem:[%s3 + $0x28] sm:$0xff]
    %v862 = vld [vmem:[%s3 + $0x30] sm:$0xff]
    %v863 = vld [vmem:[%s3 + $0x38] sm:$0xff]
    %v864 = vld [vmem:[%s4 + $0x3] sm:$0x1]
    %v865 = vlaneseq
    %v866 = vshrl.u32 %v865, 7
    %v867 = vsub.s32 0, %v866
    %v868 = vrot.slane %v864, %v867
    %v870 = vsel %vm431, %v855, 0
    %872 = vmatprep.subr.mxu0 0.0
    %873 = vmatpush1.msra.mxu0 0.0
    %874 = vmatprep.subr.mxu0 0.0
    %875 = vmatpush1.msra.mxu0 0.0
    %876 = vmatprep.subr.mxu0 0.0
    %877 = vmatpush1.msra.mxu0 0.0
    %878 = vmatprep.subr.mxu0 0.0
    %879 = vmatpush1.msra.mxu0 0.0
    %880 = vmatprep.subr.mxu0 0.0
    %881 = vmatpush1.msra.mxu0 0.0
    %882 = vmatprep.subr.mxu0 0.0
    %883 = vmatpush1.msra.mxu0 0.0
    %884 = vmatprep.subr.mxu0 0.0
    %885 = vmatpush1.msra.mxu0 0.0
    %886 = vmatprep.subr.mxu0 0.0
    %887 = vmatpush1.msra.mxu0 0.0
    %888 = vmatprep.subr.mxu0 0.0
    %889 = vmatpush1.msra.mxu0 %v863
    %890 = vmatprep.subr.mxu0 0.0
    %891 = vmatpush1.msra.mxu0 %v862
    %892 = vmatprep.subr.mxu0 0.0
    %893 = vmatpush1.msra.mxu0 %v861
    %894 = vmatprep.subr.mxu0 0.0
    %895 = vmatpush1.msra.mxu0 %v860
    %896 = vmatprep.subr.mxu0 0.0
    %897 = vmatpush1.msra.mxu0 %v859
    %898 = vmatprep.subr.mxu0 0.0
    %899 = vmatpush1.msra.mxu0 %v858
    %900 = vmatprep.subr.mxu0 0.0
    %901 = vmatpush1.msra.mxu0 %v857
    %902 = vmatprep.subr.mxu0 0.0
    %903 = vmatpush1.msra.mxu0 %v856
    %904 = vmatprep.subr.mxu0 0.0
    %905 = vmatpush2.msra.mxu0 0.0
    %906 = vmatprep.subr.mxu0 0.0
    %907 = vmatpush2.msra.mxu0 0.0
    %908 = vmatprep.subr.mxu0 0.0
    %909 = vmatpush2.msra.mxu0 0.0
    %910 = vmatprep.subr.mxu0 0.0
    %911 = vmatpush2.msra.mxu0 0.0
    %912 = vmatprep.subr.mxu0 0.0
    %913 = vmatpush2.msra.mxu0 0.0
    %914 = vmatprep.subr.mxu0 0.0
    %915 = vmatpush2.msra.mxu0 0.0
    %916 = vmatprep.subr.mxu0 0.0
    %917 = vmatpush2.msra.mxu0 0.0
    %918 = vmatprep.subr.mxu0 0.0
    %919 = vmatpush2.msra.mxu0 0.0
    %920 = vmatprep.subr.mxu0 0.0
    %921 = vmatpush2.msra.mxu0 0.0
    %922 = vmatprep.subr.mxu0 0.0
    %923 = vmatpush2.msra.mxu0 0.0
    %924 = vmatprep.subr.mxu0 0.0
    %925 = vmatpush2.msra.mxu0 0.0
    %926 = vmatprep.subr.mxu0 0.0
    %927 = vmatpush2.msra.mxu0 0.0
    %928 = vmatprep.subr.mxu0 0.0
    %929 = vmatpush2.msra.mxu0 0.0
    %930 = vmatprep.subr.mxu0 0.0
    %931 = vmatpush2.msra.mxu0 0.0
    %932 = vmatprep.subr.mxu0 0.0
    %933 = vmatpush2.msra.mxu0 0.0
    %934 = vmatprep.subr.mxu0 0.0
    %935 = vmatpush2.msra.mxu0 0.0
    %936 = vmatprep.mubr.f32.mxu0 0.0
    %937 = vmatmul.mubr.f32.gmra.mxu0 %v870
    %v938 = vpop.f32.mrf.mxu0
    %v939 = vadd.f32 %v868, %v938
    %v940 = vpop.f32.mrf.mxu0
    %941 = vdwg.mxu0
    %v942 = vtanh.pop %v939
    %v943 = vld [vmem:[%s3 + $0x40] sm:$0xff]
    %v944 = vld [vmem:[%s3 + $0x48] sm:$0xff]
    %v945 = vld [vmem:[%s3 + $0x50] sm:$0xff]
    %v946 = vld [vmem:[%s3 + $0x58] sm:$0xff]
    %v947 = vld [vmem:[%s3 + $0x60] sm:$0xff]
    %v948 = vld [vmem:[%s3 + $0x68] sm:$0xff]
    %v949 = vld [vmem:[%s3 + $0x70] sm:$0xff]
    %v950 = vld [vmem:[%s3 + $0x78] sm:$0xff]
    %v951 = vld [vmem:[%s4 + $0x4] sm:$0x1]
    %v952 = vlaneseq
    %v953 = vshrl.u32 %v952, 7
    %v954 = vsub.s32 0, %v953
    %v955 = vrot.slane %v951, %v954
    %v957 = vsel %vm431, %v942, 0
    %959 = vmatprep.subr.mxu0 0.0
    %960 = vmatpush1.msra.mxu0 0.0
    %961 = vmatprep.subr.mxu0 0.0
    %962 = vmatpush1.msra.mxu0 0.0
    %963 = vmatprep.subr.mxu0 0.0
    %964 = vmatpush1.msra.mxu0 0.0
    %965 = vmatprep.subr.mxu0 0.0
    %966 = vmatpush1.msra.mxu0 0.0
    %967 = vmatprep.subr.mxu0 0.0
    %968 = vmatpush1.msra.mxu0 0.0
    %969 = vmatprep.subr.mxu0 0.0
    %970 = vmatpush1.msra.mxu0 0.0
    %971 = vmatprep.subr.mxu0 0.0
    %972 = vmatpush1.msra.mxu0 0.0
    %973 = vmatprep.subr.mxu0 0.0
    %974 = vmatpush1.msra.mxu0 0.0
    %975 = vmatprep.subr.mxu0 0.0
    %976 = vmatpush1.msra.mxu0 %v950
    %977 = vmatprep.subr.mxu0 0.0
    %978 = vmatpush1.msra.mxu0 %v949
    %979 = vmatprep.subr.mxu0 0.0
    %980 = vmatpush1.msra.mxu0 %v948
    %981 = vmatprep.subr.mxu0 0.0
    %982 = vmatpush1.msra.mxu0 %v947
    %983 = vmatprep.subr.mxu0 0.0
    %984 = vmatpush1.msra.mxu0 %v946
    %985 = vmatprep.subr.mxu0 0.0
    %986 = vmatpush1.msra.mxu0 %v945
    %987 = vmatprep.subr.mxu0 0.0
    %988 = vmatpush1.msra.mxu0 %v944
    %989 = vmatprep.subr.mxu0 0.0
    %990 = vmatpush1.msra.mxu0 %v943
    %991 = vmatprep.subr.mxu0 0.0
    %992 = vmatpush2.msra.mxu0 0.0
    %993 = vmatprep.subr.mxu0 0.0
    %994 = vmatpush2.msra.mxu0 0.0
    %995 = vmatprep.subr.mxu0 0.0
    %996 = vmatpush2.msra.mxu0 0.0
    %997 = vmatprep.subr.mxu0 0.0
    %998 = vmatpush2.msra.mxu0 0.0
    %999 = vmatprep.subr.mxu0 0.0
    %1000 = vmatpush2.msra.mxu0 0.0
    %1001 = vmatprep.subr.mxu0 0.0
    %1002 = vmatpush2.msra.mxu0 0.0
    %1003 = vmatprep.subr.mxu0 0.0
    %1004 = vmatpush2.msra.mxu0 0.0
    %1005 = vmatprep.subr.mxu0 0.0
    %1006 = vmatpush2.msra.mxu0 0.0
    %1007 = vmatprep.subr.mxu0 0.0
    %1008 = vmatpush2.msra.mxu0 0.0
    %1009 = vmatprep.subr.mxu0 0.0
    %1010 = vmatpush2.msra.mxu0 0.0
    %1011 = vmatprep.subr.mxu0 0.0
    %1012 = vmatpush2.msra.mxu0 0.0
    %1013 = vmatprep.subr.mxu0 0.0
    %1014 = vmatpush2.msra.mxu0 0.0
    %1015 = vmatprep.subr.mxu0 0.0
    %1016 = vmatpush2.msra.mxu0 0.0
    %1017 = vmatprep.subr.mxu0 0.0
    %1018 = vmatpush2.msra.mxu0 0.0
    %1019 = vmatprep.subr.mxu0 0.0
    %1020 = vmatpush2.msra.mxu0 0.0
    %1021 = vmatprep.subr.mxu0 0.0
    %1022 = vmatpush2.msra.mxu0 0.0
    %1023 = vmatprep.mubr.f32.mxu0 0.0
    %1024 = vmatmul.mubr.f32.gmra.mxu0 %v957
    %v1025 = vpop.f32.mrf.mxu0
    %v1026 = vadd.f32 %v955, %v1025
    %v1027 = vpop.f32.mrf.mxu0
    %1028 = vdwg.mxu0
    %v1029 = vtanh.pop %v1026
    %v1030 = vld [vmem:[%s3 + $0x80] sm:$0xff]
    %v1031 = vld [vmem:[%s3 + $0x88] sm:$0xff]
    %v1032 = vld [vmem:[%s3 + $0x90] sm:$0xff]
    %v1033 = vld [vmem:[%s3 + $0x98] sm:$0xff]
    %v1034 = vld [vmem:[%s3 + $0xa0] sm:$0xff]
    %v1035 = vld [vmem:[%s3 + $0xa8] sm:$0xff]
    %v1036 = vld [vmem:[%s3 + $0xb0] sm:$0xff]
    %v1037 = vld [vmem:[%s3 + $0xb8] sm:$0xff]
    %v1038 = vld [vmem:[%s4 + $0x5] sm:$0x1]
    %v1039 = vlaneseq
    %v1040 = vshrl.u32 %v1039, 7
    %v1041 = vsub.s32 0, %v1040
    %v1042 = vrot.slane %v1038, %v1041
    %v1044 = vsel %vm431, %v1029, 0
    %1046 = vmatprep.subr.mxu0 0.0
    %1047 = vmatpush1.msra.mxu0 0.0
    %1048 = vmatprep.subr.mxu0 0.0
    %1049 = vmatpush1.msra.mxu0 0.0
    %1050 = vmatprep.subr.mxu0 0.0
    %1051 = vmatpush1.msra.mxu0 0.0
    %1052 = vmatprep.subr.mxu0 0.0
    %1053 = vmatpush1.msra.mxu0 0.0
    %1054 = vmatprep.subr.mxu0 0.0
    %1055 = vmatpush1.msra.mxu0 0.0
    %1056 = vmatprep.subr.mxu0 0.0
    %1057 = vmatpush1.msra.mxu0 0.0
    %1058 = vmatprep.subr.mxu0 0.0
    %1059 = vmatpush1.msra.mxu0 0.0
    %1060 = vmatprep.subr.mxu0 0.0
    %1061 = vmatpush1.msra.mxu0 0.0
    %1062 = vmatprep.subr.mxu0 0.0
    %1063 = vmatpush1.msra.mxu0 %v1037
    %1064 = vmatprep.subr.mxu0 0.0
    %1065 = vmatpush1.msra.mxu0 %v1036
    %1066 = vmatprep.subr.mxu0 0.0
    %1067 = vmatpush1.msra.mxu0 %v1035
    %1068 = vmatprep.subr.mxu0 0.0
    %1069 = vmatpush1.msra.mxu0 %v1034
    %1070 = vmatprep.subr.mxu0 0.0
    %1071 = vmatpush1.msra.mxu0 %v1033
    %1072 = vmatprep.subr.mxu0 0.0
    %1073 = vmatpush1.msra.mxu0 %v1032
    %1074 = vmatprep.subr.mxu0 0.0
    %1075 = vmatpush1.msra.mxu0 %v1031
    %1076 = vmatprep.subr.mxu0 0.0
    %1077 = vmatpush1.msra.mxu0 %v1030
    %1078 = vmatprep.subr.mxu0 0.0
    %1079 = vmatpush2.msra.mxu0 0.0
    %1080 = vmatprep.subr.mxu0 0.0
    %1081 = vmatpush2.msra.mxu0 0.0
    %1082 = vmatprep.subr.mxu0 0.0
    %1083 = vmatpush2.msra.mxu0 0.0
    %1084 = vmatprep.subr.mxu0 0.0
    %1085 = vmatpush2.msra.mxu0 0.0
    %1086 = vmatprep.subr.mxu0 0.0
    %1087 = vmatpush2.msra.mxu0 0.0
    %1088 = vmatprep.subr.mxu0 0.0
    %1089 = vmatpush2.msra.mxu0 0.0
    %1090 = vmatprep.subr.mxu0 0.0
    %1091 = vmatpush2.msra.mxu0 0.0
    %1092 = vmatprep.subr.mxu0 0.0
    %1093 = vmatpush2.msra.mxu0 0.0
    %1094 = vmatprep.subr.mxu0 0.0
    %1095 = vmatpush2.msra.mxu0 0.0
    %1096 = vmatprep.subr.mxu0 0.0
    %1097 = vmatpush2.msra.mxu0 0.0
    %1098 = vmatprep.subr.mxu0 0.0
    %1099 = vmatpush2.msra.mxu0 0.0
    %1100 = vmatprep.subr.mxu0 0.0
    %1101 = vmatpush2.msra.mxu0 0.0
    %1102 = vmatprep.subr.mxu0 0.0
    %1103 = vmatpush2.msra.mxu0 0.0
    %1104 = vmatprep.subr.mxu0 0.0
    %1105 = vmatpush2.msra.mxu0 0.0
    %1106 = vmatprep.subr.mxu0 0.0
    %1107 = vmatpush2.msra.mxu0 0.0
    %1108 = vmatprep.subr.mxu0 0.0
    %1109 = vmatpush2.msra.mxu0 0.0
    %1110 = vmatprep.mubr.f32.mxu0 0.0
    %1111 = vmatmul.mubr.f32.gmra.mxu0 %v1044
    %v1112 = vpop.f32.mrf.mxu0
    %v1113 = vadd.f32 %v1042, %v1112
    %v1114 = vpop.f32.mrf.mxu0
    %1115 = vdwg.mxu0
    %vm1116 = vcmask 50176
    %v1117 = vsel %vm1116, %v1113, -inf
    %1118 = vmax.xlane.f32.xlu0 %v1117
    %v1119 = vpop.xlane.xlu0 %1118
    %v1120 = vsub.f32 %v1113, %v1119
    %v1121 = vmul.f32 %v1120, 1.442695
    %v1122 = vpow.pop %v1121
    %v1123 = vsel %vm1116, %v1122, 0.0
    %1124 = vadd.xlane.f32.xlu0 %v1123
    %v1125 = vpop.xlane.xlu0 %1124
    %v1126 = vlog2.pop %v1125
    %v1127 = vmul.f32 %v1126, 0.6931472
    %v1128 = vsub.f32 %v1120, %v1127
    %1129 = vst.msk [vmem:[#allocation2] sm:$0x3] %vm1116, %v1128
    %v1130 = vld [vmem:[%s1] sm:$0x3]
    %1131 = vset.pattern.permute.xlu0 0
    %1132 = vperm.xlu0 %1131, %v1130
    %v1133 = vpop.permute.xlu0 %1132
    %vm1134 = vcmp.eq.s32.totalorder %v766, %v1133
    %v1135 = vsel %vm1134, 1.0, 0.0
    %v1136 = vmul.f32 %v1128, %v1135
    %v1137 = vsel %vm1116, %v1136, 0.0
    %1138 = vadd.xlane.f32.xlu0 %v1137
    %v1139 = vpop.xlane.xlu0 %1138
    %vm1140 = vcmask 1024
    %1141 = vst.msk [vmem:[%s6] sm:$0x3] %vm1140, %v1139
    // Predicated region
    $region22: #{disc_model_forward.1} parent=1 // pred_check
      _
    $region23: #{disc_model_forward.1} parent=1 // pred_check_branch
      %1143 = sbr.rel (0) target = $region25
    $region24: #{disc_model_forward.1} parent=1 // pred_region
      %s1145 = ssub.s32 32, 32
      %1146 = vsyncadd [#allocation3], %s1145
      %s1148 = sshll.u32 [#allocation2], 4
      %s1149 = int_to_ptr.vmem [resolvable:$true] %s1148
      %1151 = dma.vmem_to_hbm [thread:$0]  %s1149, 32, %s5, [#allocation3]
    $region25: #{disc_model_forward.1} parent=1 // pred_fallthru
      _
    // Predicated region
    $region26: #{disc_model_forward.1} parent=1 // pred_check
      _
    $region27: #{disc_model_forward.1} parent=1 // pred_check_branch
      %1153 = sbr.rel (0) target = $region29
    $region28: #{disc_model_forward.1} parent=1 // pred_region
      _
    $region29: #{disc_model_forward.1} parent=1 // pred_fallthru
      _
    // Predicated region
    $region30: #{disc_model_forward.1} parent=1 // pred_check
      _
    $region31: #{disc_model_forward.1} parent=1 // pred_check_branch
      %1155 = sbr.rel (0) target = $region33
    $region32: #{disc_model_forward.1} parent=1 // pred_region
      %1156 = dma.done [#allocation3], 32
    $region33: #{disc_model_forward.1} parent=1 // pred_fallthru
      _
    // Predicated region
    $region34: #{disc_model_forward.1} parent=1 // pred_check
      _
    $region35: #{disc_model_forward.1} parent=1 // pred_check_branch
      %1158 = sbr.rel (0) target = $region37
    $region36: #{disc_model_forward.1} parent=1 // pred_region
      _
    $region37: #{disc_model_forward.1} parent=1 // pred_fallthru
      _
    %1159 = vsyncpa [#allocation3], 1

</llo_original>
